<compile_context>
chip_gen: v5e
topology: v5e:2x2
jax: 0.10.0
libtpu: 0.0.40
codegen_flags: <defaults>
</compile_context>

<pallas_src>
import functools

import jax
import jax.numpy as jnp
from jax.experimental import pallas as pl
from jax.experimental.pallas import tpu as pltpu


_MIN_TM = 16                      # bf16 sublane-packing granule
_VMEM_BUDGET = 12 * 1024 * 1024   # conservative: fits v5e/v6e/v7x default scoped VMEM


def _cdiv(a: int, b: int) -> int:
    return (a + b - 1) // b


def _round_up(x: int, m: int) -> int:
    return _cdiv(x, m) * m


def _pick_tile_m(M: int, K_pad: int, E_pad: int, in_bytes: int, out_bytes: int,
                 tile_m: int) -> int:
    """Choose the M-tile: multiple of 16, VMEM-safe, >=4 parallel blocks,
    and (if cheap) a divisor of M so the epilogue slice copy disappears."""
    # VMEM footprint: double-buffered input/output tiles + resident weight/bias
    # (weight counted 2x to be conservative about Pallas' buffer allocation).
    fixed = 2 * K_pad * E_pad * in_bytes + 2 * E_pad * 4
    per_row = 2 * K_pad * in_bytes + 2 * E_pad * out_bytes
    vmem_cap = max(_MIN_TM,
                   ((max(_VMEM_BUDGET - fixed, 0) // max(per_row, 1))
                    // _MIN_TM) * _MIN_TM)
    # >=4 parallel blocks so both v7x TensorCores get (balanced) work.
    par_cap = max(_MIN_TM, _round_up(_cdiv(M, 4), _MIN_TM))
    tm = max(_MIN_TM, min(_round_up(max(tile_m, 1), _MIN_TM), vmem_cap, par_cap))
    # Prefer a tile that divides M exactly (no M padding -> no post-call copy),
    # but never shrink below half the cap just for that.
    for cand in range(tm, max(_MIN_TM, tm // 2) - 1, -_MIN_TM):
        if M % cand == 0:
            return cand
    return tm


def _patch_embed_kernel(x_ref, w_ref, b_ref, o_ref):
    # x_ref: (tm, K_pad) bf16 patch tile (streamed, double-buffered)
    # w_ref: (K_pad, E_pad) bf16 weight (VMEM-resident: constant index_map)
    # b_ref: (1, E_pad) f32 bias (VMEM-resident)
    # o_ref: (tm, E_pad) output stripe
    acc = jnp.dot(x_ref[...], w_ref[...], preferred_element_type=jnp.float32)
    o_ref[...] = (acc + b_ref[...]).astype(o_ref.dtype)


def patch_embedding_forward(x, weight, bias, patch_size: int, *,
                            tile_m: int = 1024,
                            compute_dtype=jnp.bfloat16,
                            out_dtype=None):
    """x: (B, C, H, W) NCHW; weight: (E, C, P, P); bias: (E,).

    Returns (B, N, E) with N = (H//P)*(W//P), matching PyTorch PatchEmbedding.
    out_dtype=None keeps x.dtype; pass jnp.bfloat16 to halve output HBM traffic.
    """
    B, C, H, W = x.shape
    E = weight.shape[0]
    P = patch_size
    assert H % P == 0 and W % P == 0, "H and W must be multiples of patch_size"
    nh, nw = H // P, W // P
    N = nh * nw
    K = C * P * P
    M = B * N

    out_dtype = x.dtype if out_dtype is None else out_dtype
    in_bytes = jnp.dtype(compute_dtype).itemsize
    out_bytes = jnp.dtype(out_dtype).itemsize

    # Lane-dense padding of the reduction and embedding dims.
    K_pad = _round_up(K, 128)
    E_pad = _round_up(E, 128)

    tm = _pick_tile_m(M, K_pad, E_pad, in_bytes, out_bytes, tile_m)
    M_pad = _round_up(M, tm)
    grid = (M_pad // tm,)

    # --- host-side layout: non-overlapping patches flattened in (c, ph, pw)
    # order — the same order Conv2d flattens its weight. (Pure layout pass;
    # see TODO above about moving it in-kernel.)
    patches = x.reshape(B, C, nh, P, nw, P).transpose(0, 2, 4, 1, 3, 5)
    patches = patches.reshape(M, K).astype(compute_dtype)
    if M_pad != M or K_pad != K:
        patches = jnp.pad(patches, ((0, M_pad - M), (0, K_pad - K)))

    # Conv2d weight (E, C, P, P) -> (K_pad, E_pad) bf16; bias -> (1, E_pad) f32.
    w_mat = weight.reshape(E, K).transpose(1, 0).astype(compute_dtype)
    if K_pad != K or E_pad != E:
        w_mat = jnp.pad(w_mat, ((0, K_pad - K), (0, E_pad - E)))
    b_mat = bias.reshape(1, E).astype(jnp.float32)
    if E_pad != E:
        b_mat = jnp.pad(b_mat, ((0, 0), (0, E_pad - E)))

    out = pl.pallas_call(
        _patch_embed_kernel,
        out_shape=jax.ShapeDtypeStruct((M_pad, E_pad), out_dtype),
        grid_spec=pltpu.PrefetchScalarGridSpec(
            num_scalar_prefetch=0,
            grid=grid,
            in_specs=[
                # Patch-row tile: streamed & double-buffered across the grid.
                pl.BlockSpec((tm, K_pad), lambda i: (i, 0)),
                # Weight / bias: constant block index -> fetched once, kept in
                # VMEM and reused by every M tile (no per-tile HBM re-stream).
                pl.BlockSpec((K_pad, E_pad), lambda i: (0, 0)),
                pl.BlockSpec((1, E_pad), lambda i: (0, 0)),
            ],
            out_specs=pl.BlockSpec((tm, E_pad), lambda i: (i, 0)),
        ),
        compiler_params=pltpu.CompilerParams(
            # M tiles are independent -> shard across v7x's 2 TensorCores.
            dimension_semantics=("parallel",),
        ),
    )(patches, w_mat, b_mat)

    # No-op when tm divides M and E is already a multiple of 128 (e.g. ViT-B).
    return out[:M, :E].reshape(B, N, E)


if __name__ == "__main__":
    # Small shapes consistent with the module: B=2, C=4, H=W=16, P=8, E=32
    B, C, H, W = 2, 4, 16, 16
    P, E = 8, 32

    key = jax.random.PRNGKey(0)
    kx, kw, kb = jax.random.split(key, 3)

    x = jax.random.normal(kx, (B, C, H, W), dtype=jnp.float32)
    # Deterministic synthetic parameters (Conv2d: weight (E, C, P, P), bias (E,))
    weight = jax.random.normal(kw, (E, C, P, P), dtype=jnp.float32) * 0.02
    bias = jax.random.normal(kb, (E,), dtype=jnp.float32) * 0.02

    fwd = jax.jit(functools.partial(patch_embedding_forward, patch_size=P,
                                    out_dtype=jnp.bfloat16))
    out = jax.block_until_ready(fwd(x, weight, bias))

    # Pure-JAX reference: same math (patch extraction + bf16 matmul, f32 accum).
    nh, nw = H // P, W // P
    ref_patches = x.reshape(B, C, nh, P, nw, P).transpose(0, 2, 4, 1, 3, 5)
    ref_patches = ref_patches.reshape(B, nh * nw, C * P * P)
    ref = jnp.einsum(
        "bnk,ek->bne",
        ref_patches.astype(jnp.bfloat16),
        weight.reshape(E, -1).astype(jnp.bfloat16),
        preferred_element_type=jnp.float32,
    ) + bias

    assert out.shape == (B, nh * nw, E)
    out_f32 = out.astype(jnp.float32)
    err = float(jnp.max(jnp.abs(out_f32 - ref)))
    assert jnp.allclose(out_f32, ref, atol=2e-2, rtol=2e-2), err

    print("KERNEL_OK")
</pallas_src>

<mosaic_0001>
module attributes {stable_mosaic.version = 11 : i64} {
  func.func @_patch_embed_kernel(%arg0: i32, %arg1: memref<16x256xbf16, #tpu.memory_space<vmem>>, %arg2: memref<256x128xbf16, #tpu.memory_space<vmem>>, %arg3: memref<1x128xf32, #tpu.memory_space<vmem>>, %arg4: memref<16x128xbf16, #tpu.memory_space<vmem>>) attributes {dimension_semantics = [#tpu.dimension_semantics<parallel>], iteration_bounds = array<i64: 1>, scalar_prefetch = 0 : i64, scratch_operands = 0 : i64, tpu.core_type = #tpu.core_type<tc>, window_params = [{transform_indices = @transform_0, window_bounds = array<i64: 16, 256>}, {pipeline_mode = #tpu.pipeline_mode<synchronous>, transform_indices = @transform_1, window_bounds = array<i64: 256, 128>}, {pipeline_mode = #tpu.pipeline_mode<synchronous>, transform_indices = @transform_2, window_bounds = array<i64: 1, 128>}, {transform_indices = @transform_3, window_bounds = array<i64: 16, 128>}]} {
    %c0 = arith.constant 0 : index
    %c0_0 = arith.constant 0 : index
    %0 = vector.load %arg1[%c0, %c0_0] : memref<16x256xbf16, #tpu.memory_space<vmem>>, vector<16x256xbf16>
    %c0_1 = arith.constant 0 : index
    %c0_2 = arith.constant 0 : index
    %1 = vector.load %arg2[%c0_1, %c0_2] : memref<256x128xbf16, #tpu.memory_space<vmem>>, vector<256x128xbf16>
    %cst = arith.constant dense<0.000000e+00> : vector<16x128xf32>
    %2 = tpu.matmul %0, %1, %cst {dimension_numbers = #tpu.dot_dimension_numbers<[1], [0], [0], [1], [0, 0, 1, 1], [], []>} : vector<16x256xbf16>, vector<256x128xbf16>, vector<16x128xf32> -> vector<16x128xf32>
    %c0_3 = arith.constant 0 : index
    %c0_4 = arith.constant 0 : index
    %3 = vector.load %arg3[%c0_3, %c0_4] : memref<1x128xf32, #tpu.memory_space<vmem>>, vector<1x128xf32>
    %4 = vector.broadcast %3 : vector<1x128xf32> to vector<16x128xf32>
    %5 = arith.addf %2, %4 : vector<16x128xf32>
    %6 = arith.truncf %5 : vector<16x128xf32> to vector<16x128xbf16>
    %c0_5 = arith.constant 0 : index
    %c0_6 = arith.constant 0 : index
    %7 = vector.load %arg4[%c0_5, %c0_6] : memref<16x128xbf16, #tpu.memory_space<vmem>>, vector<16x128xbf16>
    tpu.vector_store %arg4[%c0_5, %c0_6], %6 {strides = array<i32>} : memref<16x128xbf16, #tpu.memory_space<vmem>>, vector<16x128xbf16>,
    return
  }
  func.func @transform_0(%arg0: i32) -> (i32, i32) {
    %c0_i32 = arith.constant 0 : i32
    %c0_i32_0 = arith.constant 0 : i32
    return %arg0, %c0_i32 : i32, i32
  }
  func.func @transform_1(%arg0: i32) -> (i32, i32) {
    %c0_i32 = arith.constant 0 : i32
    %c0_i32_0 = arith.constant 0 : i32
    %c0_i32_1 = arith.constant 0 : i32
    return %c0_i32, %c0_i32_0 : i32, i32
  }
  func.func @transform_2(%arg0: i32) -> (i32, i32) {
    %c0_i32 = arith.constant 0 : i32
    %c0_i32_0 = arith.constant 0 : i32
    %c0_i32_1 = arith.constant 0 : i32
    return %c0_i32, %c0_i32_0 : i32, i32
  }
  func.func @transform_3(%arg0: i32) -> (i32, i32) {
    %c0_i32 = arith.constant 0 : i32
    %c0_i32_0 = arith.constant 0 : i32
    return %arg0, %c0_i32 : i32, i32
  }
}

</mosaic_0001>

<llo_original>
// kernel: patch_embedding_forward.1
$region0: #{patch_embedding_forward.1}
  #allocation0 [shape = 'u32[]', space=smem, size = 0x4, offset = 0x4, fixed_abs, tag = 'smem constant byte address 0x4 - core index']
  #allocation1 [shape = 'u32[72,128]{1,0:T(1,128)}', space=vmem, size = 0x9000, scoped, tag = 'internal scratch']
  %s0 = inlined_call_operand.vmem [shape: bf16[16,256], index: 0, kind: input, shape index: {}]
  %s1 = inlined_call_operand.vmem [shape: bf16[256,128], index: 1, kind: input, shape index: {}]
  %s2 = inlined_call_operand.vmem [shape: f32[1,128], index: 2, kind: input, shape index: {}]
  %s3 = inlined_call_operand.vmem [shape: bf16[16,128], index: 3, kind: output, shape index: {}]
  %s4 = sld [smem:[#allocation0]]
  $region22: #{patch_embedding_forward.1} parent=0
    _
  %s6 = ssub.s32 1, %s4
  %s7 = scalar_select 0, %s6, %s4
  // Predicated region
  $region2: #{patch_embedding_forward.1} parent=0 // pred_check
    _
  $region3: #{patch_embedding_forward.1} parent=0 // pred_check_branch
    %9 = sbr.rel (0) target = $region5
  $region4: #{patch_embedding_forward.1} parent=0 // pred_region
    _
  $region5: #{patch_embedding_forward.1} parent=0 // pred_fallthru
    _
  // Predicated region
  $region6: #{patch_embedding_forward.1} parent=0 // pred_check
    _
  $region7: #{patch_embedding_forward.1} parent=0 // pred_check_branch
    %11 = sbr.rel (0) target = $region9
  $region8: #{patch_embedding_forward.1} parent=0 // pred_region
    _
  $region9: #{patch_embedding_forward.1} parent=0 // pred_fallthru
    _
  // Predicated region
  $region10: #{patch_embedding_forward.1} parent=0 // pred_check
    _
  $region11: #{patch_embedding_forward.1} parent=0 // pred_check_branch
    %13 = sbr.rel (0) target = $region13
  $region12: #{patch_embedding_forward.1} parent=0 // pred_region
    _
  $region13: #{patch_embedding_forward.1} parent=0 // pred_fallthru
    _
  %v14 = vld [vmem:[%s0] sm:$0xff]
  %v15 = vld [vmem:[%s0 + $0x8] sm:$0xff]
  %v16 = vld [vmem:[%s1] sm:$0xf]
  %v17 = vld [vmem:[%s1 + $0x4] sm:$0xf]
  %v18 = vld [vmem:[%s1 + $0x8] sm:$0xf]
  %v19 = vld [vmem:[%s1 + $0xc] sm:$0xf]
  %v20 = vld [vmem:[%s1 + $0x10] sm:$0xf]
  %v21 = vld [vmem:[%s1 + $0x14] sm:$0xf]
  %v22 = vld [vmem:[%s1 + $0x18] sm:$0xf]
  %v23 = vld [vmem:[%s1 + $0x1c] sm:$0xf]
  %v24 = vld [vmem:[%s1 + $0x20] sm:$0xf]
  %v25 = vld [vmem:[%s1 + $0x24] sm:$0xf]
  %v26 = vld [vmem:[%s1 + $0x28] sm:$0xf]
  %v27 = vld [vmem:[%s1 + $0x2c] sm:$0xf]
  %v28 = vld [vmem:[%s1 + $0x30] sm:$0xf]
  %v29 = vld [vmem:[%s1 + $0x34] sm:$0xf]
  %v30 = vld [vmem:[%s1 + $0x38] sm:$0xf]
  %v31 = vld [vmem:[%s1 + $0x3c] sm:$0xf]
  %v32 = vld [vmem:[%s1 + $0x40] sm:$0xf]
  %v33 = vld [vmem:[%s1 + $0x44] sm:$0xf]
  %v34 = vld [vmem:[%s1 + $0x48] sm:$0xf]
  %v35 = vld [vmem:[%s1 + $0x4c] sm:$0xf]
  %v36 = vld [vmem:[%s1 + $0x50] sm:$0xf]
  %v37 = vld [vmem:[%s1 + $0x54] sm:$0xf]
  %v38 = vld [vmem:[%s1 + $0x58] sm:$0xf]
  %v39 = vld [vmem:[%s1 + $0x5c] sm:$0xf]
  %v40 = vld [vmem:[%s1 + $0x60] sm:$0xf]
  %v41 = vld [vmem:[%s1 + $0x64] sm:$0xf]
  %v42 = vld [vmem:[%s1 + $0x68] sm:$0xf]
  %v43 = vld [vmem:[%s1 + $0x6c] sm:$0xf]
  %v44 = vld [vmem:[%s1 + $0x70] sm:$0xf]
  %v45 = vld [vmem:[%s1 + $0x74] sm:$0xf]
  %v46 = vld [vmem:[%s1 + $0x78] sm:$0xf]
  %v47 = vld [vmem:[%s1 + $0x7c] sm:$0xf]
  %v48 = vld [vmem:[%s2] sm:$0x1]
  %v50 = vperm.slane %v48, 0
  %v54 = vunpack.c.l.b16 %v14
  %v55 = vunpack.c.h.b16 %v14
  %v56 = vunpack.c.l.b16 %v15
  %v57 = vunpack.c.h.b16 %v15
  %v58 = vpack.c.b16 %v56, %v54
  %v59 = vpack.c.b16 %v57, %v55
  %v94 = vunpack.c.l.b16 %v16
  %v95 = vunpack.c.l.b16 %v17
  %v96 = vunpack.c.l.b16 %v18
  %v97 = vunpack.c.l.b16 %v19
  %v98 = vunpack.c.l.b16 %v20
  %v99 = vunpack.c.l.b16 %v21
  %v100 = vunpack.c.l.b16 %v22
  %v101 = vunpack.c.l.b16 %v23
  %v102 = vunpack.c.l.b16 %v24
  %v103 = vunpack.c.l.b16 %v25
  %v104 = vunpack.c.l.b16 %v26
  %v105 = vunpack.c.l.b16 %v27
  %v106 = vunpack.c.l.b16 %v28
  %v107 = vunpack.c.l.b16 %v29
  %v108 = vunpack.c.l.b16 %v30
  %v109 = vunpack.c.l.b16 %v31
  %v110 = vunpack.c.l.b16 %v32
  %v111 = vunpack.c.l.b16 %v33
  %v112 = vunpack.c.l.b16 %v34
  %v113 = vunpack.c.l.b16 %v35
  %v114 = vunpack.c.l.b16 %v36
  %v115 = vunpack.c.l.b16 %v37
  %v116 = vunpack.c.l.b16 %v38
  %v117 = vunpack.c.l.b16 %v39
  %v118 = vunpack.c.l.b16 %v40
  %v119 = vunpack.c.l.b16 %v41
  %v120 = vunpack.c.l.b16 %v42
  %v121 = vunpack.c.l.b16 %v43
  %v122 = vunpack.c.l.b16 %v44
  %v123 = vunpack.c.l.b16 %v45
  %v124 = vunpack.c.l.b16 %v46
  %v125 = vunpack.c.l.b16 %v47
  %v126 = vpack.c.b16 %v95, %v94
  %v127 = vpack.c.b16 %v97, %v96
  %v128 = vpack.c.b16 %v99, %v98
  %v129 = vpack.c.b16 %v101, %v100
  %v130 = vpack.c.b16 %v103, %v102
  %v131 = vpack.c.b16 %v105, %v104
  %v132 = vpack.c.b16 %v107, %v106
  %v133 = vpack.c.b16 %v109, %v108
  %v134 = vpack.c.b16 %v111, %v110
  %v135 = vpack.c.b16 %v113, %v112
  %v136 = vpack.c.b16 %v115, %v114
  %v137 = vpack.c.b16 %v117, %v116
  %v138 = vpack.c.b16 %v119, %v118
  %v139 = vpack.c.b16 %v121, %v120
  %v140 = vpack.c.b16 %v123, %v122
  %v141 = vpack.c.b16 %v125, %v124
  %158 = vmatpush.bf16.msra.mxu0 %v133
  %159 = vmatpush.bf16.msra.mxu0 %v132
  %160 = vmatpush.bf16.msra.mxu0 %v131
  %161 = vmatpush.bf16.msra.mxu0 %v130
  %162 = vmatpush.bf16.msra.mxu0 %v129
  %163 = vmatpush.bf16.msra.mxu0 %v128
  %164 = vmatpush.bf16.msra.mxu0 %v127
  %165 = vmatpush.bf16.msra.mxu0 %v126
  %166 = vmatmul.bf16.gmra.mxu0 %v58
  %v167 = vpop.f32.mrf.mxu0
  %v168 = vadd.f32 %v50, %v167
  %v169 = vpop.f32.mrf.mxu0
  %v170 = vadd.f32 %v50, %v169
  %171 = vdwg.mxu0
  %172 = vmatpush.bf16.msra.mxu0 %v141
  %173 = vmatpush.bf16.msra.mxu0 %v140
  %174 = vmatpush.bf16.msra.mxu0 %v139
  %175 = vmatpush.bf16.msra.mxu0 %v138
  %176 = vmatpush.bf16.msra.mxu0 %v137
  %177 = vmatpush.bf16.msra.mxu0 %v136
  %178 = vmatpush.bf16.msra.mxu0 %v135
  %179 = vmatpush.bf16.msra.mxu0 %v134
  %180 = vmatmul.bf16.gmra.mxu0 %v59
  %v181 = vpop.f32.mrf.mxu0
  %v182 = vadd.f32 %v168, %v181
  %v183 = vpop.f32.mrf.mxu0
  %v184 = vadd.f32 %v170, %v183
  %185 = vdwg.mxu0
  %v186 = vpack.c.bf16 %v182, %v182
  %v187 = vpack.c.bf16 %v184, %v184
  %188 = vst [vmem:[%s3] sm:$0xf] %v186
  %189 = vst [vmem:[%s3 + $0x4] sm:$0xf] %v187
  // Predicated region
  $region14: #{patch_embedding_forward.1} parent=0 // pred_check
    _
  $region15: #{patch_embedding_forward.1} parent=0 // pred_check_branch
    %191 = sbr.rel (0) target = $region17
  $region16: #{patch_embedding_forward.1} parent=0 // pred_region
    _
  $region17: #{patch_embedding_forward.1} parent=0 // pred_fallthru
    _
  // Predicated region
  $region18: #{patch_embedding_forward.1} parent=0 // pred_check
    _
  $region19: #{patch_embedding_forward.1} parent=0 // pred_check_branch
    %193 = sbr.rel (0) target = $region21
  $region20: #{patch_embedding_forward.1} parent=0 // pred_region
    _
  $region21: #{patch_embedding_forward.1} parent=0 // pred_fallthru
    _

</llo_original>
